<compile_context>
chip_gen: v5e
topology: v5e:2x2
jax: 0.10.0
libtpu: 0.0.40
codegen_flags: <defaults>
</compile_context>

<pallas_src>
import functools

import jax
import jax.numpy as jnp
from jax.experimental import pallas as pl
from jax.experimental.pallas import tpu as pltpu

_NEG = -1e30
_NEG_SLOPE = 0.2   # PyG GATConv default negative_slope
_EPS = 1e-16       # PyG softmax eps


def _round_up(x, m):
    return (x + m - 1) // m * m


# ---------------------------------------------------------------------------
# Phase 1: per-node fused transform (one MXU matmul per row tile).
#   fused = x @ [W.T | Wl.T | W.T@att_src.T | W.T@att_dst.T]
# Outputs: h (source features), skip + combined bias, a_dst column, a_src row
# (a_src is emitted transposed so the aggregation kernel needs no relayout).
# ---------------------------------------------------------------------------
def _transform_kernel(x_ref, rhs_ref, bias_ref,
                      h_ref, skipb_ref, adst_ref, asrc_ref, *, c_pad):
    fused = jnp.dot(x_ref[...], rhs_ref[...],
                    preferred_element_type=jnp.float32)          # [tm, 2C+2]
    h_ref[...] = fused[:, :c_pad]                                # x @ W.T
    skipb_ref[...] = fused[:, c_pad:2 * c_pad] + bias_ref[...]   # x @ Wl.T + (gat_b+lin_b)
    asrc_ref[...] = fused[:, 2 * c_pad:2 * c_pad + 1].T          # [1, tm] (lane-dense)
    adst_ref[...] = fused[:, 2 * c_pad + 1:2 * c_pad + 2]        # [tm, 1]


def _transform_call(x_pad, rhs, bias, *, tm, c_pad):
    n_pad, f = x_pad.shape
    w = rhs.shape[1]
    kernel = functools.partial(_transform_kernel, c_pad=c_pad)
    return pl.pallas_call(
        kernel,
        grid=(n_pad // tm,),
        in_specs=[
            pl.BlockSpec((tm, f), lambda i: (i, 0)),      # node-feature row tile
            pl.BlockSpec((f, w), lambda i: (0, 0)),       # fused packed weights (fetched once)
            pl.BlockSpec((1, c_pad), lambda i: (0, 0)),   # combined bias
        ],
        out_specs=(
            pl.BlockSpec((tm, c_pad), lambda i: (i, 0)),  # h
            pl.BlockSpec((tm, c_pad), lambda i: (i, 0)),  # skip + bias
            pl.BlockSpec((tm, 1), lambda i: (i, 0)),      # a_dst column
            pl.BlockSpec((1, tm), lambda i: (0, i)),      # a_src row
        ),
        out_shape=(
            jax.ShapeDtypeStruct((n_pad, c_pad), jnp.float32),
            jax.ShapeDtypeStruct((n_pad, c_pad), jnp.float32),
            jax.ShapeDtypeStruct((n_pad, 1), jnp.float32),
            jax.ShapeDtypeStruct((1, n_pad), jnp.float32),
        ),
        compiler_params=pltpu.CompilerParams(dimension_semantics=("parallel",)),
    )(x_pad, rhs, bias)


# ---------------------------------------------------------------------------
# Phase 2: masked attention softmax + aggregation for a tile of destination rows.
# ---------------------------------------------------------------------------
def _aggregate_kernel(adj_ref, h_ref, asrc_ref, skipb_ref, adst_ref, out_ref,
                      *, apply_relu):
    mask = adj_ref[...] > 0                                       # [tm, N] (int8 in)

    e = adst_ref[...] + asrc_ref[...]                             # dst_i + src_j -> [tm, N]
    e = jnp.maximum(e, _NEG_SLOPE * e)                            # leaky_relu(., 0.2)
    e = jnp.where(mask, e, _NEG)
    p = jnp.exp(e - jnp.max(e, axis=-1, keepdims=True))
    p = jnp.where(mask, p, 0.0)                                   # [tm, N]
    denom = jnp.sum(p, axis=-1, keepdims=True) + _EPS             # [tm, 1]

    # Aggregate unnormalized on the MXU, then scale rows with an EUP reciprocal
    # (+ one Newton step -> ~f32 exact) instead of dividing the [tm, N] matrix.
    agg = jnp.dot(p, h_ref[...], preferred_element_type=jnp.float32)   # [tm, C]
    inv = pl.reciprocal(denom, approx=True)
    inv = inv * (2.0 - denom * inv)

    out = agg * inv + skipb_ref[...]
    if apply_relu:
        out = jnp.maximum(out, 0.0)
    out_ref[...] = out.astype(out_ref.dtype)


def _aggregate_call(adj_i8, h, asrc_row, skipb, adst, *, tm, c_pad, apply_relu):
    n_pad = h.shape[0]
    kernel = functools.partial(_aggregate_kernel, apply_relu=apply_relu)
    return pl.pallas_call(
        kernel,
        grid=(n_pad // tm,),
        in_specs=[
            pl.BlockSpec((tm, n_pad), lambda i: (i, 0)),    # int8 adjacency row tile (pipelined)
            pl.BlockSpec((n_pad, c_pad), lambda i: (0, 0)), # all source h (fetched once)
            pl.BlockSpec((1, n_pad), lambda i: (0, 0)),     # a_src row (fetched once)
            pl.BlockSpec((tm, c_pad), lambda i: (i, 0)),    # skip+bias tile
            pl.BlockSpec((tm, 1), lambda i: (i, 0)),        # a_dst tile
        ],
        out_specs=pl.BlockSpec((tm, c_pad), lambda i: (i, 0)),
        out_shape=jax.ShapeDtypeStruct((n_pad, c_pad), jnp.float32),
        compiler_params=pltpu.CompilerParams(dimension_semantics=("parallel",)),
    )(adj_i8, h, asrc_row, skipb, adst)


def _layer(x_pad, adj_i8, rhs, bias, *, tm, c_pad, apply_relu):
    h, skipb, adst, asrc = _transform_call(x_pad, rhs, bias, tm=tm, c_pad=c_pad)
    return _aggregate_call(adj_i8, h, asrc, skipb, adst,
                           tm=tm, c_pad=c_pad, apply_relu=apply_relu)


def _pack_layer(w, wl, att_src, att_dst, gat_b, lin_b, f_pad, c_pad):
    """Pack one layer's parameters into (rhs, bias).

    rhs[:, :c_pad]            = W.T          (zero-padded)
    rhs[:, c_pad:2c_pad]      = Wl.T         (zero-padded)
    rhs[:, 2c_pad]            = W.T @ att_src.T   (so x@col == <x@W.T, att_src>)
    rhs[:, 2c_pad+1]          = W.T @ att_dst.T
    bias                      = gat_b + lin_b (zero-padded)
    """
    c, f = w.shape
    wt = jnp.zeros((f_pad, c_pad), jnp.float32).at[:f, :c].set(w.T)
    wlt = jnp.zeros((f_pad, c_pad), jnp.float32).at[:f, :c].set(wl.T)
    asrc_col = jnp.zeros((f_pad, 1), jnp.float32).at[:f, :].set(w.T @ att_src.T)
    adst_col = jnp.zeros((f_pad, 1), jnp.float32).at[:f, :].set(w.T @ att_dst.T)
    rhs = jnp.concatenate([wt, wlt, asrc_col, adst_col], axis=1)      # [f_pad, 2*c_pad+2]
    bias = jnp.zeros((1, c_pad), jnp.float32).at[:, :c].set(gat_b + lin_b)
    return rhs, bias


def prepare(params, edge_index, num_nodes):
    """Build the (cacheable) int8 adjacency and packed/padded parameters ONCE."""
    hid, f_in = params["w1"].shape
    out = params["w2"].shape[0]
    c1_pad = _round_up(hid, 128)   # lane-dense intermediate store
    c2_pad = _round_up(out, 128)   # lane-dense final store

    if num_nodes <= 128:
        n_pad = _round_up(num_nodes, 8)
        tm = n_pad
    else:
        n_pad = _round_up(num_nodes, 128)
        tm = 128

    src, dst = edge_index[0], edge_index[1]
    # TODO(synk): duplicate edges collapse in the dense-adjacency form (multi-edges not modeled).
    adj = jnp.zeros((n_pad, n_pad), jnp.int8).at[dst, src].set(1)

    rhs1, bias1 = _pack_layer(params["w1"], params["wl1"], params["att_src1"],
                              params["att_dst1"], params["gat_b1"], params["lin_b1"],
                              f_in, c1_pad)
    rhs2, bias2 = _pack_layer(params["w2"], params["wl2"], params["att_src2"],
                              params["att_dst2"], params["gat_b2"], params["lin_b2"],
                              c1_pad, c2_pad)
    return dict(adj=adj, rhs1=rhs1, bias1=bias1, rhs2=rhs2, bias2=bias2,
                n_pad=n_pad, tm=tm, c1_pad=c1_pad, c2_pad=c2_pad, out_channels=out)


def gat_skip_forward(x, prep):
    """h1 = relu(GATConv1(x) + Linear1(x)); y = GATConv2(h1) + Linear2(h1)."""
    # TODO(synk): F.dropout between layers is identity in eval mode; training-mode
    # dropout is not implemented in-kernel.
    n = x.shape[0]
    n_pad, tm = prep["n_pad"], prep["tm"]
    x_pad = jnp.zeros((n_pad, x.shape[1]), jnp.float32).at[:n].set(x.astype(jnp.float32))
    h1 = _layer(x_pad, prep["adj"], prep["rhs1"], prep["bias1"],
                tm=tm, c_pad=prep["c1_pad"], apply_relu=True)
    y = _layer(h1, prep["adj"], prep["rhs2"], prep["bias2"],
               tm=tm, c_pad=prep["c2_pad"], apply_relu=False)
    return y[:n, :prep["out_channels"]]


def init_params(key, in_channels, hidden_channels, out_channels):
    ks = jax.random.split(key, 12)
    f32 = jnp.float32
    return {
        # GATConv1: lin weight [C1, F_in] (no bias), att vectors [1, C1], layer bias [1, C1]
        "w1": 0.2 * jax.random.normal(ks[0], (hidden_channels, in_channels), f32),
        "att_src1": 0.2 * jax.random.normal(ks[1], (1, hidden_channels), f32),
        "att_dst1": 0.2 * jax.random.normal(ks[2], (1, hidden_channels), f32),
        "gat_b1": 0.1 * jax.random.normal(ks[3], (1, hidden_channels), f32),
        # Linear1: weight [C1, F_in], bias [1, C1]
        "wl1": 0.2 * jax.random.normal(ks[4], (hidden_channels, in_channels), f32),
        "lin_b1": 0.1 * jax.random.normal(ks[5], (1, hidden_channels), f32),
        # GATConv2
        "w2": 0.2 * jax.random.normal(ks[6], (out_channels, hidden_channels), f32),
        "att_src2": 0.2 * jax.random.normal(ks[7], (1, out_channels), f32),
        "att_dst2": 0.2 * jax.random.normal(ks[8], (1, out_channels), f32),
        "gat_b2": 0.1 * jax.random.normal(ks[9], (1, out_channels), f32),
        # Linear2
        "wl2": 0.2 * jax.random.normal(ks[10], (out_channels, hidden_channels), f32),
        "lin_b2": 0.1 * jax.random.normal(ks[11], (1, out_channels), f32),
    }


def _reference(x, edge_index, params):
    """Pure-JAX reference with the same dense-adjacency math (sanity check)."""
    n = x.shape[0]
    adj = jnp.zeros((n, n), jnp.float32).at[edge_index[1], edge_index[0]].set(1.0)

    def layer(x, w, a_s, a_d, gb, wl, bl):
        h = x @ w.T
        asrc = (h * a_s).sum(-1, keepdims=True)
        adst = (h * a_d).sum(-1, keepdims=True)
        e = adst + asrc.T
        e = jnp.where(e >= 0, e, _NEG_SLOPE * e)
        e = jnp.where(adj > 0, e, _NEG)
        p = jnp.exp(e - e.max(-1, keepdims=True)) * adj
        attn = p / (p.sum(-1, keepdims=True) + _EPS)
        return attn @ h + gb + x @ wl.T + bl

    h = jax.nn.relu(layer(x, params["w1"], params["att_src1"], params["att_dst1"],
                          params["gat_b1"], params["wl1"], params["lin_b1"]))
    return layer(h, params["w2"], params["att_src2"], params["att_dst2"],
                 params["gat_b2"], params["wl2"], params["lin_b2"])


if __name__ == "__main__":
    key = jax.random.PRNGKey(0)
    kx, kp, ke1, ke2 = jax.random.split(key, 4)

    N, F_IN, HID, OUT = 8, 4, 32, 16
    x = jax.random.normal(kx, (N, F_IN), jnp.float32)

    # deterministic graph: a directed ring plus 8 random edges
    src = jnp.concatenate([jnp.arange(N), jax.random.randint(ke1, (8,), 0, N)])
    dst = jnp.concatenate([(jnp.arange(N) + 1) % N, jax.random.randint(ke2, (8,), 0, N)])
    edge_index = jnp.stack([src, dst]).astype(jnp.int32)  # [2, E]

    params = init_params(kp, F_IN, HID, OUT)

    # Adjacency + packed weights are built once and reused across forward calls.
    prep = prepare(params, edge_index, N)

    out = gat_skip_forward(x, prep)
    jax.block_until_ready(out)

    ref = _reference(x, edge_index, params)
    assert out.shape == (N, OUT), out.shape
    assert jnp.allclose(out, ref, atol=2e-4, rtol=2e-4), "mismatch vs JAX reference"
    print("KERNEL_OK")
</pallas_src>

<mosaic_0001>
module attributes {stable_mosaic.version = 11 : i64} {
  func.func @_transform_kernel(%arg0: i32, %arg1: memref<8x4xf32, #tpu.memory_space<vmem>>, %arg2: memref<4x258xf32, #tpu.memory_space<vmem>>, %arg3: memref<1x128xf32, #tpu.memory_space<vmem>>, %arg4: memref<8x128xf32, #tpu.memory_space<vmem>>, %arg5: memref<8x128xf32, #tpu.memory_space<vmem>>, %arg6: memref<8x1xf32, #tpu.memory_space<vmem>>, %arg7: memref<1x8xf32, #tpu.memory_space<vmem>>) attributes {dimension_semantics = [#tpu.dimension_semantics<parallel>], iteration_bounds = array<i64: 1>, scalar_prefetch = 0 : i64, scratch_operands = 0 : i64, tpu.core_type = #tpu.core_type<tc>, window_params = [{transform_indices = @transform_0, window_bounds = array<i64: 8, 4>}, {pipeline_mode = #tpu.pipeline_mode<synchronous>, transform_indices = @transform_1, window_bounds = array<i64: 4, 258>}, {pipeline_mode = #tpu.pipeline_mode<synchronous>, transform_indices = @transform_2, window_bounds = array<i64: 1, 128>}, {transform_indices = @transform_3, window_bounds = array<i64: 8, 128>}, {transform_indices = @transform_4, window_bounds = array<i64: 8, 128>}, {transform_indices = @transform_5, window_bounds = array<i64: 8, 1>}, {transform_indices = @transform_6, window_bounds = array<i64: 1, 8>}]} {
    %c0 = arith.constant 0 : index
    %c0_0 = arith.constant 0 : index
    %0 = vector.load %arg1[%c0, %c0_0] : memref<8x4xf32, #tpu.memory_space<vmem>>, vector<8x4xf32>
    %c0_1 = arith.constant 0 : index
    %c0_2 = arith.constant 0 : index
    %1 = vector.load %arg2[%c0_1, %c0_2] : memref<4x258xf32, #tpu.memory_space<vmem>>, vector<4x258xf32>
    %cst = arith.constant dense<0.000000e+00> : vector<8x258xf32>
    %2 = tpu.matmul %0, %1, %cst {dimension_numbers = #tpu.dot_dimension_numbers<[1], [0], [0], [1], [0, 0, 1, 1], [], []>} : vector<8x4xf32>, vector<4x258xf32>, vector<8x258xf32> -> vector<8x258xf32>
    %3 = vector.extract_strided_slice %2 {offsets = [0, 0], sizes = [8, 128], strides = [1, 1]} : vector<8x258xf32> to vector<8x128xf32>
    %c0_3 = arith.constant 0 : index
    %c0_4 = arith.constant 0 : index
    %4 = vector.load %arg4[%c0_3, %c0_4] : memref<8x128xf32, #tpu.memory_space<vmem>>, vector<8x128xf32>
    tpu.vector_store %arg4[%c0_3, %c0_4], %3 {strides = array<i32>} : memref<8x128xf32, #tpu.memory_space<vmem>>, vector<8x128xf32>,
    %5 = vector.extract_strided_slice %2 {offsets = [0, 128], sizes = [8, 128], strides = [1, 1]} : vector<8x258xf32> to vector<8x128xf32>
    %c0_5 = arith.constant 0 : index
    %c0_6 = arith.constant 0 : index
    %6 = vector.load %arg3[%c0_5, %c0_6] : memref<1x128xf32, #tpu.memory_space<vmem>>, vector<1x128xf32>
    %7 = vector.broadcast %6 : vector<1x128xf32> to vector<8x128xf32>
    %8 = arith.addf %5, %7 : vector<8x128xf32>
    %c0_7 = arith.constant 0 : index
    %c0_8 = arith.constant 0 : index
    %9 = vector.load %arg5[%c0_7, %c0_8] : memref<8x128xf32, #tpu.memory_space<vmem>>, vector<8x128xf32>
    tpu.vector_store %arg5[%c0_7, %c0_8], %8 {strides = array<i32>} : memref<8x128xf32, #tpu.memory_space<vmem>>, vector<8x128xf32>,
    %10 = vector.extract_strided_slice %2 {offsets = [0, 256], sizes = [8, 1], strides = [1, 1]} : vector<8x258xf32> to vector<8x1xf32>
    %11 = tpu.transpose %10, [1, 0] : vector<8x1xf32> -> vector<1x8xf32>
    %c0_9 = arith.constant 0 : index
    %c0_10 = arith.constant 0 : index
    %12 = vector.load %arg7[%c0_9, %c0_10] : memref<1x8xf32, #tpu.memory_space<vmem>>, vector<1x8xf32>
    tpu.vector_store %arg7[%c0_9, %c0_10], %11 {strides = array<i32>} : memref<1x8xf32, #tpu.memory_space<vmem>>, vector<1x8xf32>,
    %13 = vector.extract_strided_slice %2 {offsets = [0, 257], sizes = [8, 1], strides = [1, 1]} : vector<8x258xf32> to vector<8x1xf32>
    %c0_11 = arith.constant 0 : index
    %c0_12 = arith.constant 0 : index
    %14 = vector.load %arg6[%c0_11, %c0_12] : memref<8x1xf32, #tpu.memory_space<vmem>>, vector<8x1xf32>
    tpu.vector_store %arg6[%c0_11, %c0_12], %13 {strides = array<i32>} : memref<8x1xf32, #tpu.memory_space<vmem>>, vector<8x1xf32>,
    return
  }
  func.func @transform_0(%arg0: i32) -> (i32, i32) {
    %c0_i32 = arith.constant 0 : i32
    %c0_i32_0 = arith.constant 0 : i32
    return %arg0, %c0_i32 : i32, i32
  }
  func.func @transform_1(%arg0: i32) -> (i32, i32) {
    %c0_i32 = arith.constant 0 : i32
    %c0_i32_0 = arith.constant 0 : i32
    %c0_i32_1 = arith.constant 0 : i32
    return %c0_i32, %c0_i32_0 : i32, i32
  }
  func.func @transform_2(%arg0: i32) -> (i32, i32) {
    %c0_i32 = arith.constant 0 : i32
    %c0_i32_0 = arith.constant 0 : i32
    %c0_i32_1 = arith.constant 0 : i32
    return %c0_i32, %c0_i32_0 : i32, i32
  }
  func.func @transform_3(%arg0: i32) -> (i32, i32) {
    %c0_i32 = arith.constant 0 : i32
    %c0_i32_0 = arith.constant 0 : i32
    return %arg0, %c0_i32 : i32, i32
  }
  func.func @transform_4(%arg0: i32) -> (i32, i32) {
    %c0_i32 = arith.constant 0 : i32
    %c0_i32_0 = arith.constant 0 : i32
    return %arg0, %c0_i32 : i32, i32
  }
  func.func @transform_5(%arg0: i32) -> (i32, i32) {
    %c0_i32 = arith.constant 0 : i32
    %c0_i32_0 = arith.constant 0 : i32
    return %arg0, %c0_i32 : i32, i32
  }
  func.func @transform_6(%arg0: i32) -> (i32, i32) {
    %c0_i32 = arith.constant 0 : i32
    %c0_i32_0 = arith.constant 0 : i32
    return %c0_i32, %arg0 : i32, i32
  }
}

</mosaic_0001>

<llo_original>
// kernel: tpu_custom_call.1
$region0: #{tpu_custom_call.1}
  #allocation0 [shape = 'u32[]', space=smem, size = 0x4, offset = 0x4, fixed_abs, tag = 'smem constant byte address 0x4 - core index']
  #allocation1 [shape = 'u32[72,128]{1,0:T(1,128)}', space=vmem, size = 0x9000, scoped, tag = 'internal scratch']
  %s0 = inlined_call_operand.vmem [shape: f32[8,4], index: 0, kind: input, shape index: {}]
  %s1 = inlined_call_operand.vmem [shape: f32[4,258], index: 1, kind: input, shape index: {}]
  %s2 = inlined_call_operand.vmem [shape: f32[1,128], index: 2, kind: input, shape index: {}]
  %s3 = inlined_call_operand.hbm [shape: f32[8,128], index: 3, kind: output, shape index: {0}]
  %s4 = inlined_call_operand.hbm [shape: f32[8,128], index: 4, kind: output, shape index: {1}]
  %s5 = inlined_call_operand.vmem [shape: f32[8,1], index: 5, kind: output, shape index: {2}]
  %s6 = inlined_call_operand.hbm [shape: f32[1,8], index: 6, kind: output, shape index: {3}]
  %7 = xla_tuple %s3, %s4, %s5, %s6
  %s8 = sld [smem:[#allocation0]]
  $region46: #{tpu_custom_call.1} parent=0
    _
  %s10 = ssub.s32 1, %s8
  %s11 = scalar_select 0, %s10, %s8
  $region1: #{tpu_custom_call.1} parent=0
    #allocation2 [shape = 'u8[4096]{0}', space=vmem, size = 0x1000, scoped, tag = 'output window, operand 0, single buffered']
    #allocation3 [shape = 's32[1]{0}', space=sflag, size = 0x4, scoped, tag = 'scoped memory for tpu_custom_call.1']
    #allocation4 [shape = 'u8[4096]{0}', space=vmem, size = 0x1000, scoped, tag = 'output window, operand 1, single buffered']
    #allocation5 [shape = 's32[1]{0}', space=sflag, size = 0x4, scoped, tag = 'scoped memory for tpu_custom_call.1']
    #allocation6 [shape = 'u8[512]{0}', space=vmem, size = 0x400, scoped, tag = 'output window, operand 3, single buffered']
    %12 = vsyncpa [#allocation3], 0
    %13 = vsyncpa [#allocation5], 0
    // Predicated region
    $region2: #{tpu_custom_call.1} parent=1 // pred_check
      _
    $region3: #{tpu_custom_call.1} parent=1 // pred_check_branch
      %15 = sbr.rel (0) target = $region5
    $region4: #{tpu_custom_call.1} parent=1 // pred_region
      _
    $region5: #{tpu_custom_call.1} parent=1 // pred_fallthru
      _
    // Predicated region
    $region6: #{tpu_custom_call.1} parent=1 // pred_check
      _
    $region7: #{tpu_custom_call.1} parent=1 // pred_check_branch
      %17 = sbr.rel (0) target = $region9
    $region8: #{tpu_custom_call.1} parent=1 // pred_region
      _
    $region9: #{tpu_custom_call.1} parent=1 // pred_fallthru
      _
    // Predicated region
    $region10: #{tpu_custom_call.1} parent=1 // pred_check
      _
    $region11: #{tpu_custom_call.1} parent=1 // pred_check_branch
      %19 = sbr.rel (0) target = $region13
    $region12: #{tpu_custom_call.1} parent=1 // pred_region
      _
    $region13: #{tpu_custom_call.1} parent=1 // pred_fallthru
      _
    %v20 = vld [vmem:[%s0] sm:$0xff]
    %v21 = vld [vmem:[%s1] sm:$0xff]
    %v22 = vld [vmem:[%s1 + $0x8] sm:$0xf]
    %25 = vst [vmem:[#allocation1] ss:$2 sm:$0xff] %v21
    %s26 = scalar_lea.vmem [#allocation1], 16
    %27 = vst [vmem:[%s26] ss:$2 sm:$0xff] %v22
    %v28 = vld.sshfl [vmem:[#allocation1] sm:$0xff pattern:$0x75316420]
    %v29 = vld.sshfl [vmem:[#allocation1 + $0x8] sm:$0xff pattern:$0x75316420]
    %v30 = vld.sshfl [vmem:[#allocation1 + $0x10] sm:$0xff pattern:$0x75316420]
    %vm31 = vcmask 31744
    %v33 = vsel %vm31, %v20, 0
    %vm35 = vcmask 1043456
    %v36 = vsel %vm35, %v28, 0
    %v38 = vsel %vm35, %v29, 0
    %v40 = vsel %vm35, %v30, 0
    %42 = vmatpush.msra.mxu0 0.0
    %43 = vmatpush.msra.mxu0 0.0
    %44 = vmatpush.msra.mxu0 0.0
    %45 = vmatpush.msra.mxu0 0.0
    %46 = vmatpush.msra.mxu0 0.0
    %47 = vmatpush.msra.mxu0 0.0
    %48 = vmatpush.msra.mxu0 0.0
    %49 = vmatpush.msra.mxu0 0.0
    %50 = vmatpush.msra.mxu0 0.0
    %51 = vmatpush.msra.mxu0 0.0
    %52 = vmatpush.msra.mxu0 0.0
    %53 = vmatpush.msra.mxu0 0.0
    %54 = vmatpush.msra.mxu0 0.0
    %55 = vmatpush.msra.mxu0 0.0
    %56 = vmatpush.msra.mxu0 0.0
    %57 = vmatpush.msra.mxu0 %v36
    %58 = vmatmul.f32.gmra.mxu0 %v33
    %v59 = vpop.f32.mrf.mxu0
    %v60 = vadd.f32 0.0, %v59
    %61 = vdwg.mxu0
    %62 = vmatpush.msra.mxu0 0.0
    %63 = vmatpush.msra.mxu0 0.0
    %64 = vmatpush.msra.mxu0 0.0
    %65 = vmatpush.msra.mxu0 0.0
    %66 = vmatpush.msra.mxu0 0.0
    %67 = vmatpush.msra.mxu0 0.0
    %68 = vmatpush.msra.mxu0 0.0
    %69 = vmatpush.msra.mxu0 0.0
    %70 = vmatpush.msra.mxu0 0.0
    %71 = vmatpush.msra.mxu0 0.0
    %72 = vmatpush.msra.mxu0 0.0
    %73 = vmatpush.msra.mxu0 0.0
    %74 = vmatpush.msra.mxu0 0.0
    %75 = vmatpush.msra.mxu0 0.0
    %76 = vmatpush.msra.mxu0 0.0
    %77 = vmatpush.msra.mxu0 %v38
    %78 = vmatmul.f32.gmra.mxu0 %v33
    %v79 = vpop.f32.mrf.mxu0
    %v80 = vadd.f32 0.0, %v79
    %81 = vdwg.mxu0
    %82 = vmatpush.msra.mxu0 0.0
    %83 = vmatpush.msra.mxu0 0.0
    %84 = vmatpush.msra.mxu0 0.0
    %85 = vmatpush.msra.mxu0 0.0
    %86 = vmatpush.msra.mxu0 0.0
    %87 = vmatpush.msra.mxu0 0.0
    %88 = vmatpush.msra.mxu0 0.0
    %89 = vmatpush.msra.mxu0 0.0
    %90 = vmatpush.msra.mxu0 0.0
    %91 = vmatpush.msra.mxu0 0.0
    %92 = vmatpush.msra.mxu0 0.0
    %93 = vmatpush.msra.mxu0 0.0
    %94 = vmatpush.msra.mxu0 0.0
    %95 = vmatpush.msra.mxu0 0.0
    %96 = vmatpush.msra.mxu0 0.0
    %97 = vmatpush.msra.mxu0 %v40
    %98 = vmatmul.f32.gmra.mxu0 %v33
    %v99 = vpop.f32.mrf.mxu0
    %v100 = vadd.f32 0.0, %v99
    %101 = vdwg.mxu0
    %102 = vst [vmem:[#allocation2] sm:$0xff] %v60
    %v103 = vld [vmem:[%s2] sm:$0x1]
    %v105 = vperm.slane %v103, 0
    %v107 = vadd.f32 %v80, %v105
    %108 = vst [vmem:[#allocation4] sm:$0xff] %v107
    %109 = vxpose.xlu0.b32.start [1/16] %v100, 128
    %110 = vxpose.xlu0.b32.cont [2/16] 0.0, 128
    %111 = vxpose.xlu0.b32.cont [3/16] 0.0, 128
    %112 = vxpose.xlu0.b32.cont [4/16] 0.0, 128
    %113 = vxpose.xlu0.b32.cont [5/16] 0.0, 128
    %114 = vxpose.xlu0.b32.cont [6/16] 0.0, 128
    %115 = vxpose.xlu0.b32.cont [7/16] 0.0, 128
    %116 = vxpose.xlu0.b32.cont [8/16] 0.0, 128
    %117 = vxpose.xlu0.b32.cont [9/16] 0.0, 128
    %118 = vxpose.xlu0.b32.cont [10/16] 0.0, 128
    %119 = vxpose.xlu0.b32.cont [11/16] 0.0, 128
    %120 = vxpose.xlu0.b32.cont [12/16] 0.0, 128
    %121 = vxpose.xlu0.b32.cont [13/16] 0.0, 128
    %122 = vxpose.xlu0.b32.cont [14/16] 0.0, 128
    %123 = vxpose.xlu0.b32.cont [15/16] 0.0, 128
    %124 = vxpose.xlu0.b32.end [16/16] 0.0, 128
    %v125 = vpop.trf.xlu0
    %v126 = vpop.trf.xlu0
    %v127 = vpop.trf.xlu0
    %v128 = vpop.trf.xlu0
    %v129 = vpop.trf.xlu0
    %v130 = vpop.trf.xlu0
    %v131 = vpop.trf.xlu0
    %v132 = vpop.trf.xlu0
    %v133 = vpop.trf.xlu0
    %v134 = vpop.trf.xlu0
    %v135 = vpop.trf.xlu0
    %v136 = vpop.trf.xlu0
    %v137 = vpop.trf.xlu0
    %v138 = vpop.trf.xlu0
    %v139 = vpop.trf.xlu0
    %v140 = vpop.trf.xlu0
    %vm141 = vcmask 57344
    %142 = vst.msk [vmem:[#allocation6] sm:$0x1] %vm141, %v125
    %144 = vrot.lane.b32.xlu0 %v100, 127
    %v145 = vpop.permute.xlu0 %144
    %vm147 = vcmask 7168
    %148 = vst.msk [vmem:[%s5] sm:$0xff] %vm147, %v145
    // Predicated region
    $region14: #{tpu_custom_call.1} parent=1 // pred_check
      _
    $region15: #{tpu_custom_call.1} parent=1 // pred_check_branch
      %150 = sbr.rel (0) target = $region17
    $region16: #{tpu_custom_call.1} parent=1 // pred_region
      %152 = vsyncadd [#allocation3], 0
      %s154 = sshll.u32 [#allocation2], 4
      %s155 = int_to_ptr.vmem [resolvable:$true] %s154
      %s156 = sshll.u32 %s3, 4
      %s157 = int_to_ptr.hbm [resolvable:$true] %s156
      %159 = dma.vmem_to_hbm [thread:$0]  %s155, 128, %s157, [#allocation3]
    $region17: #{tpu_custom_call.1} parent=1 // pred_fallthru
      _
    // Predicated region
    $region18: #{tpu_custom_call.1} parent=1 // pred_check
      _
    $region19: #{tpu_custom_call.1} parent=1 // pred_check_branch
      %161 = sbr.rel (0) target = $region21
    $region20: #{tpu_custom_call.1} parent=1 // pred_region
      %163 = vsyncadd [#allocation5], 0
      %s165 = sshll.u32 [#allocation4], 4
      %s166 = int_to_ptr.vmem [resolvable:$true] %s165
      %s167 = sshll.u32 %s4, 4
      %s168 = int_to_ptr.hbm [resolvable:$true] %s167
      %170 = dma.vmem_to_hbm [thread:$0]  %s166, 128, %s168, [#allocation5]
    $region21: #{tpu_custom_call.1} parent=1 // pred_fallthru
      _
    // Predicated region
    $region22: #{tpu_custom_call.1} parent=1 // pred_check
      _
    $region23: #{tpu_custom_call.1} parent=1 // pred_check_branch
      %172 = sbr.rel (0) target = $region25
    $region24: #{tpu_custom_call.1} parent=1 // pred_region
      _
    $region25: #{tpu_custom_call.1} parent=1 // pred_fallthru
      _
    // Predicated region
    $region26: #{tpu_custom_call.1} parent=1 // pred_check
      _
    $region27: #{tpu_custom_call.1} parent=1 // pred_check_branch
      %174 = sbr.rel (0) target = $region29
    $region28: #{tpu_custom_call.1} parent=1 // pred_region
      %176 = vsyncadd [#allocation5], 0
      %s178 = sshll.u32 [#allocation6], 4
      %s179 = int_to_ptr.vmem [resolvable:$true] %s178
      %s180 = sshll.u32 %s6, 4
      %s181 = int_to_ptr.hbm [resolvable:$true] %s180
      %183 = dma.vmem_to_hbm [thread:$0]  %s179, 16, %s181, [#allocation5]
    $region29: #{tpu_custom_call.1} parent=1 // pred_fallthru
      _
    // Predicated region
    $region30: #{tpu_custom_call.1} parent=1 // pred_check
      _
    $region31: #{tpu_custom_call.1} parent=1 // pred_check_branch
      %185 = sbr.rel (0) target = $region33
    $region32: #{tpu_custom_call.1} parent=1 // pred_region
      %187 = dma.done [#allocation3], 128
    $region33: #{tpu_custom_call.1} parent=1 // pred_fallthru
      _
    // Predicated region
    $region34: #{tpu_custom_call.1} parent=1 // pred_check
      _
    $region35: #{tpu_custom_call.1} parent=1 // pred_check_branch
      %189 = sbr.rel (0) target = $region37
    $region36: #{tpu_custom_call.1} parent=1 // pred_region
      %191 = dma.done [#allocation5], 128
    $region37: #{tpu_custom_call.1} parent=1 // pred_fallthru
      _
    // Predicated region
    $region38: #{tpu_custom_call.1} parent=1 // pred_check
      _
    $region39: #{tpu_custom_call.1} parent=1 // pred_check_branch
      %193 = sbr.rel (0) target = $region41
    $region40: #{tpu_custom_call.1} parent=1 // pred_region
      _
    $region41: #{tpu_custom_call.1} parent=1 // pred_fallthru
      _
    // Predicated region
    $region42: #{tpu_custom_call.1} parent=1 // pred_check
      _
    $region43: #{tpu_custom_call.1} parent=1 // pred_check_branch
      %195 = sbr.rel (0) target = $region45
    $region44: #{tpu_custom_call.1} parent=1 // pred_region
      %197 = dma.done [#allocation5], 16
    $region45: #{tpu_custom_call.1} parent=1 // pred_fallthru
      _
    %198 = vsyncpa [#allocation3], 1
    %199 = vsyncpa [#allocation5], 1

</llo_original>
